<compile_context>
chip_gen: v7x
topology: tpu7x:2x2x1
jax: 0.10.0
libtpu: 0.0.40
codegen_flags: <defaults>
</compile_context>

<pallas_src>
import functools

import jax
import jax.numpy as jnp
from jax.experimental import pallas as pl
from jax.experimental.pallas import tpu as pltpu

_VMEM_INPUT_BUDGET = 8 * 1024 * 1024   # double-buffered (logits + labels) bytes
_MAX_TILE_PX = 65536                   # upper bound on pixels per grid block


def _ce2d_kernel(x_ref, t_ref, out_ref, *, ignore_label, h):
    """One (batch, h-tile) block -> (loss_sum, valid_count) partials."""
    c, h_tile, w = x_ref.shape
    t = t_ref[...]                                    # (h_tile, w) int32

    # Sweep 1 (fused): running channel max + target-class logit select.
    # NOTE: labels outside [0, c) that are neither negative nor ignore_label
    # would be counted valid with sel = 0 (PyTorch would raise); we assume
    # well-formed labels, matching the original module's contract.
    x0 = x_ref[0].astype(jnp.float32)                 # (h_tile, w)
    m = x0
    sel = jnp.where(t == 0, x0, 0.0)
    for k in range(1, c):
        xk = x_ref[k].astype(jnp.float32)
        m = jnp.maximum(m, xk)
        sel = jnp.where(t == k, xk, sel)

    # Sweep 2: stable sum of exp over channels (re-reads the VMEM block).
    s = jnp.exp(x_ref[0].astype(jnp.float32) - m)
    for k in range(1, c):
        s = s + jnp.exp(x_ref[k].astype(jnp.float32) - m)

    loss = (m + jnp.log(s)) - sel                     # per-pixel CE term

    valid = jnp.logical_and(t >= 0, t != ignore_label)
    if h % h_tile != 0:
        # Ragged spatial tail: the last block reads unspecified data, so the
        # mask must come from indices, never from the (garbage) labels.
        row = jax.lax.broadcasted_iota(jnp.int32, (h_tile, w), 0)
        valid = jnp.logical_and(valid, pl.program_id(1) * h_tile + row < h)

    loss_sum = jnp.sum(jnp.where(valid, loss, 0.0), keepdims=True)   # (1, 1)
    cnt_sum = jnp.sum(valid.astype(jnp.float32), keepdims=True)      # (1, 1)

    # Lane-dense (8, 128) partial block: row 0 carries loss, row 1 the count.
    r = jax.lax.broadcasted_iota(jnp.int32, (8, 128), 0)
    out_ref[0, 0] = jnp.where(r == 0, loss_sum,
                              jnp.where(r == 1, cnt_sum, 0.0))


def _pick_h_tile(c, h, w, itemsize):
    """Rows per block: ~32-64K pixels, <= ~8 MiB double-buffered inputs."""
    bytes_per_row = (c * itemsize + 4) * w            # logits + int32 labels
    rows_budget = max(1, _VMEM_INPUT_BUDGET // (2 * bytes_per_row))
    rows_px = max(1, _MAX_TILE_PX // w)
    h_tile = min(h, rows_budget, rows_px)
    if h_tile < h:
        h_tile = max(8, (h_tile // 8) * 8)            # (8, 128) block rule
        if h_tile >= h:
            h_tile = h
    return h_tile


@functools.partial(jax.jit, static_argnames=("size_average", "ignore_label"))
def _cross_entropy_2d_impl(predict, target, size_average, ignore_label):
    n, c, h, w = predict.shape
    t = target.astype(jnp.int32)

    h_tile = _pick_h_tile(c, h, w, jnp.dtype(predict.dtype).itemsize)
    num_tiles = -(-h // h_tile)
    grid = (n, num_tiles)

    partials = pl.pallas_call(
        functools.partial(_ce2d_kernel, ignore_label=ignore_label, h=h),
        out_shape=jax.ShapeDtypeStruct((n, num_tiles, 8, 128), jnp.float32),
        grid_spec=pltpu.PrefetchScalarGridSpec(
            num_scalar_prefetch=0,
            grid=grid,
            in_specs=[
                pl.BlockSpec((pl.Squeezed(), c, h_tile, w),
                             lambda b, hi: (b, 0, hi, 0)),
                pl.BlockSpec((pl.Squeezed(), h_tile, w),
                             lambda b, hi: (b, hi, 0)),
            ],
            out_specs=pl.BlockSpec((1, 1, 8, 128),
                                   lambda b, hi: (b, hi, 0, 0)),
        ),
        compiler_params=pltpu.CompilerParams(
            # No cross-step state -> both axes can shard across TCs (v7x).
            dimension_semantics=("parallel", "parallel"),
            vmem_limit_bytes=32 * 1024 * 1024,
        ),
    )(predict, t)

    loss_sum = jnp.sum(partials[:, :, 0, 0])
    count = jnp.sum(partials[:, :, 1, 0])

    if size_average:
        return jnp.where(count > 0, loss_sum / jnp.maximum(count, 1.0), 0.0)
    return jnp.where(count > 0, loss_sum, 0.0)


def cross_entropy_2d(predict, target, weight=None, size_average=True,
                     ignore_label=253):
    """Pallas implementation of CrossEntropy2d.forward."""
    # TODO(synk): per-class `weight` rescaling (F.cross_entropy weight=...) not implemented.
    if weight is not None:
        raise NotImplementedError("per-class weight is not supported")
    return _cross_entropy_2d_impl(predict, target,
                                  size_average=size_average,
                                  ignore_label=ignore_label)


def _reference(predict, target, ignore_label=253, size_average=True):
    logp = jax.nn.log_softmax(predict.astype(jnp.float32), axis=1)
    t = target.astype(jnp.int32)
    valid = jnp.logical_and(t >= 0, t != ignore_label)
    t_safe = jnp.where(valid, t, 0)
    sel = jnp.take_along_axis(logp, t_safe[:, None, :, :], axis=1)[:, 0]
    total = jnp.sum(jnp.where(valid, -sel, 0.0))
    cnt = jnp.sum(valid.astype(jnp.float32))
    if size_average:
        return jnp.where(cnt > 0, total / jnp.maximum(cnt, 1.0), 0.0)
    return total


if __name__ == "__main__":
    key = jax.random.PRNGKey(0)
    k1, k2, k3 = jax.random.split(key, 3)

    # Small NCHW shapes consistent with the module: batch=2, classes=4, 16x16.
    n, c, h, w = 2, 4, 16, 16
    predict = jax.random.normal(k1, (n, c, h, w), dtype=jnp.float32)
    target = jax.random.randint(k2, (n, h, w), 0, c, dtype=jnp.int32)
    # Sprinkle ignore_label pixels to exercise the masking path.
    drop = jax.random.uniform(k3, (n, h, w)) < 0.15
    target = jnp.where(drop, jnp.int32(253), target)

    loss = cross_entropy_2d(predict, target)
    jax.block_until_ready(loss)
    ref = _reference(predict, target)
    assert jnp.allclose(loss, ref, atol=1e-5, rtol=1e-5), (loss, ref)

    # Second small case forcing multiple h-tiles + a ragged tail block, to
    # exercise the index-based tail masking path.
    _MAX_TILE_PX = 128  # noqa: F811  (rebind module constant before tracing)
    n2, c2, h2, w2 = 1, 3, 20, 16
    k4, k5 = jax.random.split(k3)
    predict2 = jax.random.normal(k4, (n2, c2, h2, w2), dtype=jnp.float32)
    target2 = jax.random.randint(k5, (n2, h2, w2), -1, c2, dtype=jnp.int32)
    loss2 = cross_entropy_2d(predict2, target2)
    jax.block_until_ready(loss2)
    ref2 = _reference(predict2, target2)
    assert jnp.allclose(loss2, ref2, atol=1e-5, rtol=1e-5), (loss2, ref2)
    _MAX_TILE_PX = 65536

    print("KERNEL_OK")
</pallas_src>

<mosaic_0001>
module attributes {stable_mosaic.version = 11 : i64} {
  func.func @_ce2d_kernel(%arg0: i32, %arg1: i32, %arg2: memref<1x4x16x16xf32, #tpu.memory_space<vmem>>, %arg3: memref<1x16x16xi32, #tpu.memory_space<vmem>>, %arg4: memref<1x1x8x128xf32, #tpu.memory_space<vmem>>) attributes {dimension_semantics = [#tpu.dimension_semantics<parallel>, #tpu.dimension_semantics<parallel>], iteration_bounds = array<i64: 2, 1>, scalar_prefetch = 0 : i64, scratch_operands = 0 : i64, tpu.core_type = #tpu.core_type<tc>, window_params = [{transform_indices = @transform_0, window_bounds = array<i64: 1, 4, 16, 16>}, {transform_indices = @transform_1, window_bounds = array<i64: 1, 16, 16>}, {transform_indices = @transform_2, window_bounds = array<i64: 1, 1, 8, 128>}]} {
    %c0 = arith.constant 0 : index
    %c0_0 = arith.constant 0 : index
    %c0_1 = arith.constant 0 : index
    %0 = vector.load %arg3[%c0, %c0_0, %c0_1] : memref<1x16x16xi32, #tpu.memory_space<vmem>>, vector<1x16x16xi32>
    %1 = vector.shape_cast %0 : vector<1x16x16xi32> to vector<16x16xi32>
    %c0_2 = arith.constant 0 : index
    %c0_3 = arith.constant 0 : index
    %c0_4 = arith.constant 0 : index
    %c0_5 = arith.constant 0 : index
    %2 = vector.load %arg2[%c0_2, %c0_3, %c0_4, %c0_5] : memref<1x4x16x16xf32, #tpu.memory_space<vmem>>, vector<1x1x16x16xf32>
    %3 = vector.shape_cast %2 : vector<1x1x16x16xf32> to vector<16x16xf32>
    %c0_i32 = arith.constant 0 : i32
    %4 = vector.broadcast %c0_i32 : i32 to vector<16x16xi32>
    %5 = arith.cmpi eq, %1, %4 : vector<16x16xi32>
    %cst = arith.constant 0.000000e+00 : f32
    %6 = vector.broadcast %cst : f32 to vector<16x16xf32>
    %7 = arith.select %5, %3, %6 : vector<16x16xi1>, vector<16x16xf32>
    %c0_6 = arith.constant 0 : index
    %c1 = arith.constant 1 : index
    %c0_7 = arith.constant 0 : index
    %c0_8 = arith.constant 0 : index
    %8 = vector.load %arg2[%c0_6, %c1, %c0_7, %c0_8] : memref<1x4x16x16xf32, #tpu.memory_space<vmem>>, vector<1x1x16x16xf32>
    %9 = vector.shape_cast %8 : vector<1x1x16x16xf32> to vector<16x16xf32>
    %10 = arith.maximumf %3, %9 : vector<16x16xf32>
    %c1_i32 = arith.constant 1 : i32
    %11 = vector.broadcast %c1_i32 : i32 to vector<16x16xi32>
    %12 = arith.cmpi eq, %1, %11 : vector<16x16xi32>
    %13 = arith.select %12, %9, %7 : vector<16x16xi1>, vector<16x16xf32>
    %c0_9 = arith.constant 0 : index
    %c2 = arith.constant 2 : index
    %c0_10 = arith.constant 0 : index
    %c0_11 = arith.constant 0 : index
    %14 = vector.load %arg2[%c0_9, %c2, %c0_10, %c0_11] : memref<1x4x16x16xf32, #tpu.memory_space<vmem>>, vector<1x1x16x16xf32>
    %15 = vector.shape_cast %14 : vector<1x1x16x16xf32> to vector<16x16xf32>
    %16 = arith.maximumf %10, %15 : vector<16x16xf32>
    %c2_i32 = arith.constant 2 : i32
    %17 = vector.broadcast %c2_i32 : i32 to vector<16x16xi32>
    %18 = arith.cmpi eq, %1, %17 : vector<16x16xi32>
    %19 = arith.select %18, %15, %13 : vector<16x16xi1>, vector<16x16xf32>
    %c0_12 = arith.constant 0 : index
    %c3 = arith.constant 3 : index
    %c0_13 = arith.constant 0 : index
    %c0_14 = arith.constant 0 : index
    %20 = vector.load %arg2[%c0_12, %c3, %c0_13, %c0_14] : memref<1x4x16x16xf32, #tpu.memory_space<vmem>>, vector<1x1x16x16xf32>
    %21 = vector.shape_cast %20 : vector<1x1x16x16xf32> to vector<16x16xf32>
    %22 = arith.maximumf %16, %21 : vector<16x16xf32>
    %c3_i32 = arith.constant 3 : i32
    %23 = vector.broadcast %c3_i32 : i32 to vector<16x16xi32>
    %24 = arith.cmpi eq, %1, %23 : vector<16x16xi32>
    %25 = arith.select %24, %21, %19 : vector<16x16xi1>, vector<16x16xf32>
    %c0_15 = arith.constant 0 : index
    %c0_16 = arith.constant 0 : index
    %c0_17 = arith.constant 0 : index
    %c0_18 = arith.constant 0 : index
    %26 = vector.load %arg2[%c0_15, %c0_16, %c0_17, %c0_18] : memref<1x4x16x16xf32, #tpu.memory_space<vmem>>, vector<1x1x16x16xf32>
    %27 = vector.shape_cast %26 : vector<1x1x16x16xf32> to vector<16x16xf32>
    %28 = arith.subf %27, %22 : vector<16x16xf32>
    %29 = math.exp %28 : vector<16x16xf32>
    %c0_19 = arith.constant 0 : index
    %c1_20 = arith.constant 1 : index
    %c0_21 = arith.constant 0 : index
    %c0_22 = arith.constant 0 : index
    %30 = vector.load %arg2[%c0_19, %c1_20, %c0_21, %c0_22] : memref<1x4x16x16xf32, #tpu.memory_space<vmem>>, vector<1x1x16x16xf32>
    %31 = vector.shape_cast %30 : vector<1x1x16x16xf32> to vector<16x16xf32>
    %32 = arith.subf %31, %22 : vector<16x16xf32>
    %33 = math.exp %32 : vector<16x16xf32>
    %34 = arith.addf %29, %33 : vector<16x16xf32>
    %c0_23 = arith.constant 0 : index
    %c2_24 = arith.constant 2 : index
    %c0_25 = arith.constant 0 : index
    %c0_26 = arith.constant 0 : index
    %35 = vector.load %arg2[%c0_23, %c2_24, %c0_25, %c0_26] : memref<1x4x16x16xf32, #tpu.memory_space<vmem>>, vector<1x1x16x16xf32>
    %36 = vector.shape_cast %35 : vector<1x1x16x16xf32> to vector<16x16xf32>
    %37 = arith.subf %36, %22 : vector<16x16xf32>
    %38 = math.exp %37 : vector<16x16xf32>
    %39 = arith.addf %34, %38 : vector<16x16xf32>
    %c0_27 = arith.constant 0 : index
    %c3_28 = arith.constant 3 : index
    %c0_29 = arith.constant 0 : index
    %c0_30 = arith.constant 0 : index
    %40 = vector.load %arg2[%c0_27, %c3_28, %c0_29, %c0_30] : memref<1x4x16x16xf32, #tpu.memory_space<vmem>>, vector<1x1x16x16xf32>
    %41 = vector.shape_cast %40 : vector<1x1x16x16xf32> to vector<16x16xf32>
    %42 = arith.subf %41, %22 : vector<16x16xf32>
    %43 = math.exp %42 : vector<16x16xf32>
    %44 = arith.addf %39, %43 : vector<16x16xf32>
    %45 = math.log %44 : vector<16x16xf32>
    %46 = arith.addf %22, %45 : vector<16x16xf32>
    %47 = arith.subf %46, %25 : vector<16x16xf32>
    %c0_i32_31 = arith.constant 0 : i32
    %48 = vector.broadcast %c0_i32_31 : i32 to vector<16x16xi32>
    %49 = arith.cmpi sge, %1, %48 : vector<16x16xi32>
    %c253_i32 = arith.constant 253 : i32
    %50 = vector.broadcast %c253_i32 : i32 to vector<16x16xi32>
    %51 = arith.cmpi ne, %1, %50 : vector<16x16xi32>
    %52 = arith.andi %49, %51 : vector<16x16xi1>
    %cst_32 = arith.constant 0.000000e+00 : f32
    %53 = vector.broadcast %cst_32 : f32 to vector<16x16xf32>
    %54 = arith.select %52, %47, %53 : vector<16x16xi1>, vector<16x16xf32>
    %55 = vector.shape_cast %54 : vector<16x16xf32> to vector<1x16x16xf32>
    %cst_33 = arith.constant dense<0.000000e+00> : vector<1xf32>
    %56 = vector.multi_reduction <add>, %55, %cst_33 [1, 2] : vector<1x16x16xf32> to vector<1xf32>
    %57 = vector.shape_cast %56 : vector<1xf32> to vector<1x1x1xf32>
    %58 = vector.extract %57[0, 0, 0] : f32 from vector<1x1x1xf32>
    %59 = vector.broadcast %58 : f32 to vector<1x1xf32>
    %60 = arith.extui %52 : vector<16x16xi1> to vector<16x16xi32>
    %61 = arith.sitofp %60 : vector<16x16xi32> to vector<16x16xf32>
    %62 = vector.shape_cast %61 : vector<16x16xf32> to vector<1x16x16xf32>
    %cst_34 = arith.constant dense<0.000000e+00> : vector<1xf32>
    %63 = vector.multi_reduction <add>, %62, %cst_34 [1, 2] : vector<1x16x16xf32> to vector<1xf32>
    %64 = vector.shape_cast %63 : vector<1xf32> to vector<1x1x1xf32>
    %65 = vector.extract %64[0, 0, 0] : f32 from vector<1x1x1xf32>
    %66 = vector.broadcast %65 : f32 to vector<1x1xf32>
    %67 = tpu.iota {dimensions = array<i32: 0>} : vector<8x128xi32>
    %c0_i32_35 = arith.constant 0 : i32
    %68 = vector.broadcast %c0_i32_35 : i32 to vector<8x128xi32>
    %69 = arith.cmpi eq, %67, %68 : vector<8x128xi32>
    %c1_i32_36 = arith.constant 1 : i32
    %70 = vector.broadcast %c1_i32_36 : i32 to vector<8x128xi32>
    %71 = arith.cmpi eq, %67, %70 : vector<8x128xi32>
    %cst_37 = arith.constant 0.000000e+00 : f32
    %72 = vector.shape_cast %66 : vector<1x1xf32> to vector<1x1xf32>
    %73 = vector.broadcast %72 : vector<1x1xf32> to vector<8x128xf32>
    %74 = vector.broadcast %cst_37 : f32 to vector<8x128xf32>
    %75 = arith.select %71, %73, %74 : vector<8x128xi1>, vector<8x128xf32>
    %76 = vector.shape_cast %59 : vector<1x1xf32> to vector<1x1xf32>
    %77 = vector.broadcast %76 : vector<1x1xf32> to vector<8x128xf32>
    %78 = arith.select %69, %77, %75 : vector<8x128xi1>, vector<8x128xf32>
    %c0_38 = arith.constant 0 : index
    %c0_39 = arith.constant 0 : index
    %c0_40 = arith.constant 0 : index
    %c0_41 = arith.constant 0 : index
    %79 = vector.load %arg4[%c0_38, %c0_39, %c0_40, %c0_41] : memref<1x1x8x128xf32, #tpu.memory_space<vmem>>, vector<1x1x8x128xf32>
    %80 = vector.shape_cast %79 : vector<1x1x8x128xf32> to vector<8x128xf32>
    %81 = vector.shape_cast %78 : vector<8x128xf32> to vector<1x1x8x128xf32>
    tpu.vector_store %arg4[%c0_38, %c0_39, %c0_40, %c0_41], %81 {strides = array<i32>} : memref<1x1x8x128xf32, #tpu.memory_space<vmem>>, vector<1x1x8x128xf32>,
    return
  }
  func.func @transform_0(%arg0: i32, %arg1: i32) -> (i32, i32, i32, i32) {
    %c0_i32 = arith.constant 0 : i32
    %c0_i32_0 = arith.constant 0 : i32
    %c0_i32_1 = arith.constant 0 : i32
    return %arg0, %c0_i32, %arg1, %c0_i32_0 : i32, i32, i32, i32
  }
  func.func @transform_1(%arg0: i32, %arg1: i32) -> (i32, i32, i32) {
    %c0_i32 = arith.constant 0 : i32
    %c0_i32_0 = arith.constant 0 : i32
    return %arg0, %arg1, %c0_i32 : i32, i32, i32
  }
  func.func @transform_2(%arg0: i32, %arg1: i32) -> (i32, i32, i32, i32) {
    %c0_i32 = arith.constant 0 : i32
    %c0_i32_0 = arith.constant 0 : i32
    %c0_i32_1 = arith.constant 0 : i32
    return %arg0, %arg1, %c0_i32, %c0_i32_0 : i32, i32, i32, i32
  }
}

</mosaic_0001>

<llo_original>
// kernel: _cross_entropy_2d_impl.1
$region0: #{_cross_entropy_2d_impl.1}
  #allocation0 [shape = 'u32[]', space=smem, size = 0x4, offset = 0x4, fixed_abs, tag = 'smem constant byte address 0x4 - core index']
  #allocation1 [shape = 'u32[144,128]{1,0:T(1,128)}', space=vmem, size = 0x12000, scoped, tag = 'internal scratch']
  %s0 = inlined_call_operand.hbm [shape: f32[2,4,16,16], index: 0, kind: input, shape index: {}]
  %s1 = inlined_call_operand.hbm [shape: s32[2,16,16], index: 1, kind: input, shape index: {}]
  %s2 = inlined_call_operand.vmem [shape: f32[2,1,8,128], index: 2, kind: output, shape index: {}]
  %s3 = sld [smem:[#allocation0]]
  $region49: #{_cross_entropy_2d_impl.1} parent=0
    _
  %s5 = ssub.s32 1, %s3
  %s6 = scalar_select 0, %s5, %s3
  $region1: #{_cross_entropy_2d_impl.1} parent=0
    #allocation2 [shape = 'u8[65536]{0}', space=vmem, size = 0x10000, scoped, tag = 'input window, operand 0']
    #allocation3 [shape = 's32[2]{0}', space=sflag, size = 0x8, scoped, tag = 'scoped memory for _cross_entropy_2d_impl.1']
    #allocation4 [shape = 'u8[16384]{0}', space=vmem, size = 0x4000, scoped, tag = 'input window, operand 1']
    #allocation5 [shape = 's32[2]{0}', space=sflag, size = 0x8, scoped, tag = 'scoped memory for _cross_entropy_2d_impl.1']
    %7 = vsyncpa [#allocation3], 0
    %s8 = scalar_lea.sflag [#allocation3], 1
    %9 = vsyncpa %s8, 0
    %10 = vsyncpa [#allocation5], 0
    %s11 = scalar_lea.sflag [#allocation5], 1
    %12 = vsyncpa %s11, 0
    loop: start=0, step=1, limit=4
    $region2: #{_cross_entropy_2d_impl.1} parent=1 // loop_pre_header
      _
    $region3: #{_cross_entropy_2d_impl.1} parent=1 // loop_header
      %s14 = sphi 0, %s18
      %p15 = scmp.ge.s32.totalorder %s14, 4
      %s21 = sphi 0, %s33
      %s22 = sphi 0, %s29
      %s23 = sphi 0, %s21
      %s24 = sphi 0, %s22
      %s25 = sphi 0, %s23
      %s26 = sphi 0, %s24
      %s38 = sphi 0, %s40
      %s41 = sphi 0, %s38
      %s42 = sphi 0, %s41
      %s58 = sphi 0, %s42
      %s66 = sphi 0, %s68
      %s69 = sphi 0, %s66
      %s70 = sphi 0, %s69
      %s86 = sphi 0, %s70
      %s94 = sphi 0, %s96
      %s97 = sphi 0, %s94
      %s98 = sphi 0, %s97
      %s114 = sphi 0, %s98
    $region4: #{_cross_entropy_2d_impl.1} parent=1 // loop_header_branch
      %17 = sbr.rel (%p15) target = $region8
    $region5: #{_cross_entropy_2d_impl.1} parent=1 // loop_body
      %s19 = ssub.s32 %s14, 1
      %s20 = ssub.s32 %s14, 2
      %s27 = sadd.s32 1, %s22
      %p28 = scmp.ge.s32.totalorder %s27, 1
      %s29 = scalar_select %p28, 0, %s27
      %s30 = sadd.s32 1, %s21
      %s31 = scalar_select %p28, %s30, %s21
      %p32 = scmp.ge.s32.totalorder %s31, 2
      %s33 = scalar_select %p32, 0, %s31
      %s34 = ssub.s32 %s21, %s33
      %s35 = ssub.s32 %s22, %s29
      %s36 = sor.u32 %s34, %s35
      %p37 = scmp.eq.s32.totalorder %s36, 0
      %s39 = sadd.s32 %s38, 1
      %s40 = scalar_select %p37, %s38, %s39
      %p43 = pneg %p37
      %p44 = scmp.eq.s32.totalorder %s14, 1
      %p45 = por %p43, %p44
      %p46 = scmp.ne.s32.totalorder %s38, %s41
      %p47 = scmp.eq.s32.totalorder %s14, 0
      %p48 = por %p46, %p47
      %p49 = scmp.ne.s32.totalorder %s38, %s41
      %p50 = scmp.eq.s32.totalorder %s19, 1
      %p51 = por %p49, %p50
      %p52 = scmp.ne.s32.totalorder %s41, %s42
      %p53 = scmp.eq.s32.totalorder %s19, 0
      %p54 = por %p52, %p53
      %p55 = scmp.ne.s32.totalorder %s41, %s42
      %p56 = scmp.eq.s32.totalorder %s20, 1
      %p57 = por %p55, %p56
      %p59 = scmp.ne.s32.totalorder %s42, %s58
      %p60 = scmp.eq.s32.totalorder %s20, 0
      %p61 = por %p59, %p60
      %s62 = ssub.s32 %s21, %s33
      %s63 = ssub.s32 %s22, %s29
      %s64 = sor.u32 %s62, %s63
      %p65 = scmp.eq.s32.totalorder %s64, 0
      %s67 = sadd.s32 %s66, 1
      %s68 = scalar_select %p65, %s66, %s67
      %p71 = pneg %p65
      %p72 = scmp.eq.s32.totalorder %s14, 1
      %p73 = por %p71, %p72
      %p74 = scmp.ne.s32.totalorder %s66, %s69
      %p75 = scmp.eq.s32.totalorder %s14, 0
      %p76 = por %p74, %p75
      %p77 = scmp.ne.s32.totalorder %s66, %s69
      %p78 = scmp.eq.s32.totalorder %s19, 1
      %p79 = por %p77, %p78
      %p80 = scmp.ne.s32.totalorder %s69, %s70
      %p81 = scmp.eq.s32.totalorder %s19, 0
      %p82 = por %p80, %p81
      %p83 = scmp.ne.s32.totalorder %s69, %s70
      %p84 = scmp.eq.s32.totalorder %s20, 1
      %p85 = por %p83, %p84
      %p87 = scmp.ne.s32.totalorder %s70, %s86
      %p88 = scmp.eq.s32.totalorder %s20, 0
      %p89 = por %p87, %p88
      %s90 = ssub.s32 %s21, %s33
      %s91 = ssub.s32 %s22, %s29
      %s92 = sor.u32 %s90, %s91
      %p93 = scmp.eq.s32.totalorder %s92, 0
      %s95 = sadd.s32 %s94, 1
      %s96 = scalar_select %p93, %s94, %s95
      %p99 = pneg %p93
      %p100 = scmp.eq.s32.totalorder %s14, 1
      %p101 = por %p99, %p100
      %p102 = scmp.ne.s32.totalorder %s94, %s97
      %p103 = scmp.eq.s32.totalorder %s14, 0
      %p104 = por %p102, %p103
      %p105 = scmp.ne.s32.totalorder %s94, %s97
      %p106 = scmp.eq.s32.totalorder %s19, 1
      %p107 = por %p105, %p106
      %p108 = scmp.ne.s32.totalorder %s97, %s98
      %p109 = scmp.eq.s32.totalorder %s19, 0
      %p110 = por %p108, %p109
      %p111 = scmp.ne.s32.totalorder %s97, %s98
      %p112 = scmp.eq.s32.totalorder %s20, 1
      %p113 = por %p111, %p112
      %p115 = scmp.ne.s32.totalorder %s98, %s114
      %p116 = scmp.eq.s32.totalorder %s20, 0
      %p117 = por %p115, %p116
      %p118 = scmp.le.s32.totalorder 1, %s14
      %p119 = scmp.lt.s32.totalorder %s14, 3
      %p120 = pnand %p118, %p119
      %p121 = pneg %p120
      // Predicated region
      $region9: #{_cross_entropy_2d_impl.1} parent=5 // pred_check
        _
      $region10: #{_cross_entropy_2d_impl.1} parent=5 // pred_check_branch
        %123 = sbr.rel (%p120) target = $region12
      $region11: #{_cross_entropy_2d_impl.1} parent=5 // pred_region
        %s124 = ssub.s32 %s14, 1
      $region12: #{_cross_entropy_2d_impl.1} parent=5 // pred_fallthru
        _
      %p125 = scmp.lt.s32.totalorder %s14, 2
      // Predicated region
      $region13: #{_cross_entropy_2d_impl.1} parent=5 // pred_check
        %p126 = pneg %p125
      $region14: #{_cross_entropy_2d_impl.1} parent=5 // pred_check_branch
        %128 = sbr.rel (%p126) target = $region16
      $region15: #{_cross_entropy_2d_impl.1} parent=5 // pred_region
        // Predicated region
        $region17: #{_cross_entropy_2d_impl.1} parent=15 // pred_check
          %p129 = pneg %p48
        $region18: #{_cross_entropy_2d_impl.1} parent=15 // pred_check_branch
          %131 = sbr.rel (%p129) target = $region20
        $region19: #{_cross_entropy_2d_impl.1} parent=15 // pred_region
          %s132 = sand.u32 %s38, 1
          %s133 = scalar_lea.sflag [#allocation3], %s132
          %s134 = sand.u32 %s38, 1
          %s135 = smul.addr %s134, 64
          %s136 = scalar_lea.vmem [#allocation2], %s135
          %s137 = smul.u32 2, %s22
          %s139 = ssub.s32 1024, 1024
          %140 = vsyncadd %s133, %s139
          %s141 = smul.addr %s21, 8
          %s142 = sadd.s32 %s137, %s141
          %s143 = smul.addr %s142, 128
          %s144 = scalar_lea.hbm %s0, %s143
          %s145 = sshll.u32 %s136, 4
          %s146 = int_to_ptr.vmem [resolvable:$true] %s145
          %151 = dma.hbm_to_vmem [thread:$0]  %s144, 1024, %s146, %s133, 128, 128, 8
        $region20: #{_cross_entropy_2d_impl.1} parent=15 // pred_fallthru
          _
        // Predicated region
        $region21: #{_cross_entropy_2d_impl.1} parent=15 // pred_check
          %p152 = pneg %p76
        $region22: #{_cross_entropy_2d_impl.1} parent=15 // pred_check_branch
          %154 = sbr.rel (%p152) target = $region24
        $region23: #{_cross_entropy_2d_impl.1} parent=15 // pred_region
          %s155 = sand.u32 %s66, 1
          %s156 = scalar_lea.sflag [#allocation5], %s155
          %s157 = sand.u32 %s66, 1
          %s158 = smul.addr %s157, 16
          %s159 = scalar_lea.vmem [#allocation4], %s158
          %s160 = smul.u32 2, %s22
          %s162 = ssub.s32 256, 256
          %163 = vsyncadd %s156, %s162
          %s164 = smul.addr %s21, 2
          %s165 = sadd.s32 %s160, %s164
          %s166 = smul.addr %s165, 128
          %s167 = scalar_lea.hbm %s1, %s166
          %s168 = sshll.u32 %s159, 4
          %s169 = int_to_ptr.vmem [resolvable:$true] %s168
          %174 = dma.hbm_to_vmem [thread:$0]  %s167, 256, %s169, %s156, 128, 128, 8
        $region24: #{_cross_entropy_2d_impl.1} parent=15 // pred_fallthru
          _
      $region16: #{_cross_entropy_2d_impl.1} parent=5 // pred_fallthru
        _
      %p175 = scmp.le.s32.totalorder 1, %s14
      %p176 = scmp.lt.s32.totalorder %s14, 3
      %p177 = pnand %p175, %p176
      %p178 = pneg %p177
      // Predicated region
      $region25: #{_cross_entropy_2d_impl.1} parent=5 // pred_check
        _
      $region26: #{_cross_entropy_2d_impl.1} parent=5 // pred_check_branch
        %180 = sbr.rel (%p177) target = $region28
      $region27: #{_cross_entropy_2d_impl.1} parent=5 // pred_region
        %s181 = ssub.s32 %s14, 1
        %s182 = sand.u32 %s41, 1
        %s183 = scalar_lea.sflag [#allocation3], %s182
        %s184 = sand.u32 %s41, 1
        %s185 = smul.addr %s184, 64
        %s186 = scalar_lea.vmem [#allocation2], %s185
        // Predicated region
        $region29: #{_cross_entropy_2d_impl.1} parent=27 // pred_check
          %p187 = pneg %p54
        $region30: #{_cross_entropy_2d_impl.1} parent=27 // pred_check_branch
          %189 = sbr.rel (%p187) target = $region32
        $region31: #{_cross_entropy_2d_impl.1} parent=27 // pred_region
          %190 = dma.done %s183, 1024
        $region32: #{_cross_entropy_2d_impl.1} parent=27 // pred_fallthru
          _
        %s191 = sand.u32 %s69, 1
        %s192 = scalar_lea.sflag [#allocation5], %s191
        %s193 = sand.u32 %s69, 1
        %s194 = smul.addr %s193, 16
        %s195 = scalar_lea.vmem [#allocation4], %s194
        // Predicated region
        $region33: #{_cross_entropy_2d_impl.1} parent=27 // pred_check
          %p196 = pneg %p82
        $region34: #{_cross_entropy_2d_impl.1} parent=27 // pred_check_branch
          %198 = sbr.rel (%p196) target = $region36
        $region35: #{_cross_entropy_2d_impl.1} parent=27 // pred_region
          %199 = dma.done %s192, 256
        $region36: #{_cross_entropy_2d_impl.1} parent=27 // pred_fallthru
          _
        %s200 = sand.u32 %s41, 1
        %s201 = scalar_lea.sflag [#allocation3], %s200
        %s202 = sand.u32 %s41, 1
        %s203 = smul.addr %s202, 64
        %s204 = scalar_lea.vmem [#allocation2], %s203
        %p205 = pneg %p54
        %p206 = pneg %p51
        %s207 = sand.u32 %s69, 1
        %s208 = scalar_lea.sflag [#allocation5], %s207
        %s209 = sand.u32 %s69, 1
        %s210 = smul.addr %s209, 16
        %s211 = scalar_lea.vmem [#allocation4], %s210
        %p212 = pneg %p82
        %p213 = pneg %p79
        %p214 = pneg %p110
        %p215 = pneg %p107
        %p216 = scmp.lt.s32.totalorder %s23, 1
        %s217 = scalar_select %p216, %s23, 1
        %p218 = scmp.lt.s32.totalorder %s24, 0
        %s219 = scalar_select %p218, %s24, 0
        %s220 = sadd.s32 %s219, %s217
        %s221 = smul.addr %s220, 8
        %s222 = scalar_lea.vmem %s2, %s221
        %s223 = smul.u32 2, %s24
        %s224 = smul.u32 2, %s24
        %p225 = scmp.lt.s32.totalorder %s23, 1
        %s226 = scalar_select %p225, %s23, 1
        %p227 = scmp.lt.s32.totalorder %s24, 0
        %s228 = scalar_select %p227, %s24, 0
        %s229 = sadd.s32 %s228, %s226
        %s230 = smul.addr %s229, 8
        %s231 = scalar_lea.vmem %s2, %s230
        %v232 = vld [vmem:[%s195] sm:$0xff]
        %v233 = vld [vmem:[%s195 + $0x8] sm:$0xff]
        %v234 = vld [vmem:[%s186] sm:$0xff]
        %v235 = vld [vmem:[%s186 + $0x8] sm:$0xff]
        %vm236 = vcmp.eq.s32.totalorder %v232, 0
        %vm237 = vcmp.eq.s32.totalorder %v233, 0
        %v238 = vsel %vm236, %v234, 0.0
        %v239 = vsel %vm237, %v235, 0.0
        %s240 = scalar_lea.vmem %s186, 16 [#allocation2]
        %v241 = vld [vmem:[%s240] sm:$0xff]
        %v242 = vld [vmem:[%s240 + $0x8] sm:$0xff]
        %v243 = vmax.f32 %v234, %v241
        %v244 = vmax.f32 %v235, %v242
        %vm245 = vcmp.eq.s32.totalorder %v232, 1
        %vm246 = vcmp.eq.s32.totalorder %v233, 1
        %v247 = vsel %vm245, %v241, %v238
        %v248 = vsel %vm246, %v242, %v239
        %s249 = scalar_lea.vmem %s186, 32 [#allocation2]
        %v250 = vld [vmem:[%s249] sm:$0xff]
        %v251 = vld [vmem:[%s249 + $0x8] sm:$0xff]
        %v252 = vmax.f32 %v243, %v250
        %v253 = vmax.f32 %v244, %v251
        %vm254 = vcmp.eq.s32.totalorder %v232, 2
        %vm255 = vcmp.eq.s32.totalorder %v233, 2
        %v256 = vsel %vm254, %v250, %v247
        %v257 = vsel %vm255, %v251, %v248
        %s258 = scalar_lea.vmem %s186, 48 [#allocation2]
        %v259 = vld [vmem:[%s258] sm:$0xff]
        %v260 = vld [vmem:[%s258 + $0x8] sm:$0xff]
        %v261 = vmax.f32 %v252, %v259
        %v262 = vmax.f32 %v253, %v260
        %vm263 = vcmp.eq.s32.totalorder %v232, 3
        %vm264 = vcmp.eq.s32.totalorder %v233, 3
        %v265 = vsel %vm263, %v259, %v256
        %v266 = vsel %vm264, %v260, %v257
        %v267 = vsub.f32 %v234, %v261
        %v268 = vsub.f32 %v235, %v262
        %v269 = vmul.f32 %v267, 1.442695
        %v270 = vpow.pop %v269
        %v271 = vmul.f32 %v268, 1.442695
        %v272 = vpow.pop %v271
        %v273 = vsub.f32 %v241, %v261
        %v274 = vsub.f32 %v242, %v262
        %v275 = vmul.f32 %v273, 1.442695
        %v276 = vpow.pop %v275
        %v277 = vmul.f32 %v274, 1.442695
        %v278 = vpow.pop %v277
        %v279 = vadd.f32 %v270, %v276
        %v280 = vadd.f32 %v272, %v278
        %v281 = vsub.f32 %v250, %v261
        %v282 = vsub.f32 %v251, %v262
        %v283 = vmul.f32 %v281, 1.442695
        %v284 = vpow.pop %v283
        %v285 = vmul.f32 %v282, 1.442695
        %v286 = vpow.pop %v285
        %v287 = vadd.f32 %v279, %v284
        %v288 = vadd.f32 %v280, %v286
        %v289 = vsub.f32 %v259, %v261
        %v290 = vsub.f32 %v260, %v262
        %v291 = vmul.f32 %v289, 1.442695
        %v292 = vpow.pop %v291
        %v293 = vmul.f32 %v290, 1.442695
        %v294 = vpow.pop %v293
        %v295 = vadd.f32 %v287, %v292
        %v296 = vadd.f32 %v288, %v294
        %v297 = vlog2.pop %v295
        %v298 = vmul.f32 %v297, 0.6931472
        %v299 = vlog2.pop %v296
        %v300 = vmul.f32 %v299, 0.6931472
        %v301 = vadd.f32 %v261, %v298
        %v302 = vadd.f32 %v262, %v300
        %v303 = vsub.f32 %v301, %v265
        %v304 = vsub.f32 %v302, %v266
        %vm305 = vcmp.ge.s32.totalorder %v232, 0
        %vm306 = vcmp.ge.s32.totalorder %v233, 0
        %vm307 = vcmp.ne.s32.totalorder %v232, 253
        %vm308 = vcmp.ne.s32.totalorder %v233, 253
        %vm309 = vmand %vm305, %vm307
        %vm310 = vmand %vm306, %vm308
        %v311 = vsel %vm309, %v303, 0.0
        %v312 = vsel %vm310, %v304, 0.0
        %vm313 = vcmask 130048
        %v314 = vsel %vm313, %v311, 0.0
        %v315 = vsel %vm313, %v312, 0.0
        %v316 = vadd.f32 %v314, %v315
        %317 = vadd.xlane.f32.xlu0 %v316
        %v318 = vpop.xlane.xlu0 %317
        %v319 = vrot.slane %v318, 4
        %v320 = vadd.f32 %v318, %v319
        %v321 = vrot.slane %v320, 2
        %v322 = vadd.f32 %v320, %v321
        %v323 = vrot.slane %v322, 1
        %v324 = vadd.f32 %v322, %v323
        %s325 = vtos %v324
        %v326 = vsel %vm309, 1, 0
        %v327 = vsel %vm310, 1, 0
        %v328 = vcvt.s32.f32 %v326
        %v329 = vcvt.s32.f32 %v327
        %v330 = vsel %vm313, %v328, 0.0
        %v331 = vsel %vm313, %v329, 0.0
        %v332 = vadd.f32 %v330, %v331
        %333 = vadd.xlane.f32.xlu0 %v332
        %v334 = vpop.xlane.xlu0 %333
        %v335 = vrot.slane %v334, 4
        %v336 = vadd.f32 %v334, %v335
        %v337 = vrot.slane %v336, 2
        %v338 = vadd.f32 %v336, %v337
        %v339 = vrot.slane %v338, 1
        %v340 = vadd.f32 %v338, %v339
        %s341 = vtos %v340
        %v342 = vlaneseq
        %v343 = vshrl.u32 %v342, 7
        %vm344 = vcmp.eq.s32.totalorder %v343, 0
        %vm345 = vcmp.eq.s32.totalorder %v343, 1
        %v346 = vstv %s341
        %v347 = vsel %vm345, %v346, 0.0
        %v348 = vstv %s325
        %v349 = vsel %vm344, %v348, %v347
        %350 = vst [vmem:[%s231] sm:$0xff] %v349
        %p351 = scmp.lt.s32.totalorder %s23, 1
        %s352 = scalar_select %p351, %s23, 1
        %p353 = scmp.lt.s32.totalorder %s24, 0
        %s354 = scalar_select %p353, %s24, 0
        %s355 = sadd.s32 %s354, %s352
        %s356 = smul.addr %s355, 8
        %s357 = scalar_lea.vmem %s2, %s356
        // Predicated region
        $region37: #{_cross_entropy_2d_impl.1} parent=27 // pred_check
          %p358 = pneg %p107
        $region38: #{_cross_entropy_2d_impl.1} parent=27 // pred_check_branch
          %360 = sbr.rel (%p358) target = $region40
        $region39: #{_cross_entropy_2d_impl.1} parent=27 // pred_region
          _
        $region40: #{_cross_entropy_2d_impl.1} parent=27 // pred_fallthru
          _
      $region28: #{_cross_entropy_2d_impl.1} parent=5 // pred_fallthru
        _
      %p361 = scmp.le.s32.totalorder 2, %s14
      // Predicated region
      $region41: #{_cross_entropy_2d_impl.1} parent=5 // pred_check
        %p362 = pneg %p361
      $region42: #{_cross_entropy_2d_impl.1} parent=5 // pred_check_branch
        %364 = sbr.rel (%p362) target = $region44
      $region43: #{_cross_entropy_2d_impl.1} parent=5 // pred_region
        %s365 = ssub.s32 %s14, 2
        // Predicated region
        $region45: #{_cross_entropy_2d_impl.1} parent=43 // pred_check
          %p366 = pneg %p113
        $region46: #{_cross_entropy_2d_impl.1} parent=43 // pred_check_branch
          %368 = sbr.rel (%p366) target = $region48
        $region47: #{_cross_entropy_2d_impl.1} parent=43 // pred_region
          %p369 = scmp.lt.s32.totalorder %s25, 1
          %s370 = scalar_select %p369, %s25, 1
          %p371 = scmp.lt.s32.totalorder %s26, 0
          %s372 = scalar_select %p371, %s26, 0
          %s373 = sadd.s32 %s372, %s370
          %s374 = smul.addr %s373, 8
          %s375 = scalar_lea.vmem %s2, %s374
        $region48: #{_cross_entropy_2d_impl.1} parent=43 // pred_fallthru
          _
      $region44: #{_cross_entropy_2d_impl.1} parent=5 // pred_fallthru
        _
    $region6: #{_cross_entropy_2d_impl.1} parent=1 // loop_footer
      %s18 = sadd.s32 1, %s14
    $region7: #{_cross_entropy_2d_impl.1} parent=1 // loop_footer_branch
      %13 = sbr.rel target = $region3
    $region8: #{_cross_entropy_2d_impl.1} parent=1 // loop_exit
      _
    %376 = vsyncpa [#allocation3], 1
    %s377 = scalar_lea.sflag [#allocation3], 1
    %378 = vsyncpa %s377, 1
    %379 = vsyncpa [#allocation5], 1
    %s380 = scalar_lea.sflag [#allocation5], 1
    %381 = vsyncpa %s380, 1

</llo_original>
